<compile_context>
chip_gen: v7x
topology: tpu7x:2x2x1
jax: 0.10.0
libtpu: 0.0.40
codegen_flags: <defaults>
</compile_context>

<pallas_src>
import functools

import jax
import jax.numpy as jnp
from jax.experimental import pallas as pl
from jax.experimental.pallas import tpu as pltpu

SELU_ALPHA = 1.6732632423543772
SELU_SCALE = 1.0507009873554805


def _selu(x):
    # scale * (max(0,x) + min(0, alpha*(exp(x)-1)))
    # NOTE: alpha*(exp(x)-1) is evaluated on both branches of the select; for
    # large positive x the unselected branch overflows to +inf, which is
    # benign under jnp.where (no NaN).  Do NOT rewrite this as a
    # multiply-by-mask form — that would turn inf*0 into NaN.
    return SELU_SCALE * jnp.where(x > 0, x, SELU_ALPHA * (jnp.exp(x) - 1.0))


def _mlp_kernel(x_ref, w01_ref, b01_ref, w2_ref, w3_ref, b3_ref, o_ref):
    x = x_ref[...]                                   # (TB, 784)

    # fused f0+f1: Linear(784 -> 57) with folded bias
    h = jnp.dot(x, w01_ref[...], preferred_element_type=jnp.float32) + b01_ref[...]

    # f2: SELU
    h = _selu(h)

    # f3: Linear(57 -> 12, no bias)
    h = jnp.dot(h.astype(w2_ref.dtype), w2_ref[...],
                preferred_element_type=jnp.float32)

    # f4: SELU
    h = _selu(h)

    # f5: Linear(12 -> 10, bias)
    h = jnp.dot(h.astype(w3_ref.dtype), w3_ref[...],
                preferred_element_type=jnp.float32) + b3_ref[...]

    # f6: LogSoftmax over dim=1 (feature axis), f32 throughout.
    # Purely row-local, so garbage rows of a partial last block cannot
    # contaminate valid rows (their stores are masked away anyway).
    m = jnp.max(h, axis=-1, keepdims=True)
    s = h - m
    lse = jnp.log(jnp.sum(jnp.exp(s), axis=-1, keepdims=True))
    o_ref[...] = s - lse


def _round_up(n, m):
    return ((n + m - 1) // m) * m


def _choose_tile(batch, tile_b):
    """Batch-tile selection.

    Never exceeds `batch` (so the only partial block is a trailing one that is
    strictly inside the array), and prefers >= 2 grid steps for moderately
    sized batches so dimension_semantics=("parallel",) can shard the batch
    axis across both TensorCores on v7x.
    """
    if batch > tile_b:
        return tile_b
    if batch >= 512:
        # Two roughly equal tiles (sublane-aligned); still >= 256 rows each so
        # the ~0.35 us per-step overhead stays negligible.
        return _round_up((batch + 1) // 2, 8)
    return batch  # single exact-size block: block dims == array dims


@functools.partial(jax.jit, static_argnames=("tile_b", "matmul_dtype"))
def linear_selu_12_forward(x_nchw, params, *, tile_b=2048,
                           matmul_dtype=jnp.float32):
    """x_nchw: (B, 1, 28, 28) float32. Returns (B, 10) log-probabilities.

    matmul_dtype=jnp.bfloat16 halves the MXU operand width on v6e/v7x
    (accumulation stays f32) but only pays off if the x stream is bf16 at rest
    upstream; a standalone astype is an extra HBM pass.  Default stays f32 so
    the 1e-4 reference tolerance holds everywhere.
    """
    B = x_nchw.shape[0]
    x = x_nchw.reshape(B, 784).astype(jnp.float32)

    w0, b0, w1, w2, w3, b3 = params
    # Host-side fusion of f0/f1 (pure algebra; only changes rounding order).
    w01 = jnp.dot(w0, w1, preferred_element_type=jnp.float32)        # (784, 57)
    b01 = jnp.dot(b0, w1, preferred_element_type=jnp.float32).reshape(1, -1)
    b3 = b3.reshape(1, -1)

    TB = _choose_tile(B, tile_b)
    grid_b = -(-B // TB)                  # ceil(B / TB); trailing block masked
    grid = (grid_b,)

    # Optional low-precision matmul operands (f32 accumulate in-kernel).
    if matmul_dtype == jnp.float32:
        x_in, w01_in, w2_in, w3_in = x, w01, w2, w3
    else:
        x_in = x.astype(matmul_dtype)
        w01_in = w01.astype(matmul_dtype)
        w2_in = w2.astype(matmul_dtype)
        w3_in = w3.astype(matmul_dtype)

    const = lambda shape: pl.BlockSpec(shape, lambda i: tuple(0 for _ in shape))

    cost = pl.CostEstimate(
        flops=2 * B * (784 * 57 + 57 * 12 + 12 * 10),
        transcendentals=B * (57 + 12 + 10 + 1),
        bytes_accessed=(B * 784 * x_in.dtype.itemsize
                        + B * 10 * 4
                        + (784 * 57 + 57 * 12 + 12 * 10) * w01_in.dtype.itemsize
                        + (57 + 10) * 4),
    )

    # Only raise the scoped-VMEM limit when a bigger-than-default tile is
    # requested (e.g. TB=4096 on v5e/v6e); the TB=2048 default fits the 32 MiB
    # scoped default on every generation including v7x.
    vmem_need = (2 * TB * 784 * x_in.dtype.itemsize          # x, double-buffered
                 + 2 * TB * 10 * 4                            # out, double-buffered
                 + 2 * (784 * 57 + 57 + 57 * 12 + 12 * 10 + 10) * 4)  # weights
    if vmem_need > (24 << 20):
        compiler_params = pltpu.CompilerParams(
            dimension_semantics=("parallel",),
            vmem_limit_bytes=min(int(vmem_need * 3 // 2), 100 << 20))
    else:
        compiler_params = pltpu.CompilerParams(
            dimension_semantics=("parallel",))                # 2 TCs on v7x

    out = pl.pallas_call(
        _mlp_kernel,
        out_shape=jax.ShapeDtypeStruct((B, 10), jnp.float32),
        grid=grid,
        in_specs=[
            pl.BlockSpec((TB, 784), lambda i: (i, 0)),   # x: streamed per tile
            const((784, 57)),                            # w01: resident
            const((1, 57)),                              # b01: resident
            const((57, 12)),                             # w2:  resident
            const((12, 10)),                             # w3:  resident
            const((1, 10)),                              # b3:  resident
        ],
        out_specs=pl.BlockSpec((TB, 10), lambda i: (i, 0)),
        compiler_params=compiler_params,
        cost_estimate=cost,
    )(x_in, w01_in, b01, w2_in, w3_in, b3)

    return out


def init_params(key):
    """Deterministic PyTorch-style (uniform +/- 1/sqrt(fan_in)) init.
    Weights are stored as (in_features, out_features)."""
    def linear_w(key, fan_in, fan_out):
        bound = 1.0 / jnp.sqrt(jnp.float32(fan_in))
        return jax.random.uniform(key, (fan_in, fan_out), jnp.float32, -bound, bound)

    k0, kb0, k1, k2, k3, kb3 = jax.random.split(key, 6)
    w0 = linear_w(k0, 784, 108)
    b0 = jax.random.uniform(kb0, (108,), jnp.float32,
                            -1.0 / jnp.sqrt(784.0), 1.0 / jnp.sqrt(784.0))
    w1 = linear_w(k1, 108, 57)
    w2 = linear_w(k2, 57, 12)
    w3 = linear_w(k3, 12, 10)
    b3 = jax.random.uniform(kb3, (10,), jnp.float32,
                            -1.0 / jnp.sqrt(12.0), 1.0 / jnp.sqrt(12.0))
    return (w0, b0, w1, w2, w3, b3)


def reference_forward(x_nchw, params):
    """Pure-JAX reference matching the unfused torch forward."""
    w0, b0, w1, w2, w3, b3 = params
    x = x_nchw.reshape(x_nchw.shape[0], 784).astype(jnp.float32)
    h = x @ w0 + b0
    h = h @ w1
    h = _selu(h)
    h = h @ w2
    h = _selu(h)
    h = h @ w3 + b3
    return jax.nn.log_softmax(h, axis=1)


if __name__ == "__main__":
    key = jax.random.PRNGKey(0)
    kx, kx2, kp = jax.random.split(key, 3)
    params = init_params(kp)

    # Small canonical test (single exact-size block).
    B = 2
    x = jax.random.normal(kx, (B, 1, 28, 28), dtype=jnp.float32)
    out = jax.block_until_ready(linear_selu_12_forward(x, params))
    ref = reference_forward(x, params)
    assert out.shape == (B, 10)
    # Tolerance slightly loosened vs. 1e-5: the w0@w1 fold changes f32
    # rounding order relative to the unfused reference.
    assert jnp.allclose(out, ref, atol=1e-4, rtol=1e-4), "mismatch vs reference"
    assert jnp.allclose(jnp.exp(out).sum(axis=1), 1.0, atol=1e-5)

    # Secondary check: exercises the split-into-two-tiles path and a masked
    # partial trailing block (523 rows -> TB=264, grid=2, last block 259 rows).
    B2 = 523
    x2 = jax.random.normal(kx2, (B2, 1, 28, 28), dtype=jnp.float32)
    out2 = jax.block_until_ready(linear_selu_12_forward(x2, params))
    ref2 = reference_forward(x2, params)
    assert out2.shape == (B2, 10)
    assert jnp.allclose(out2, ref2, atol=1e-4, rtol=1e-4), "mismatch (partial block)"
    assert jnp.allclose(jnp.exp(out2).sum(axis=1), 1.0, atol=1e-5)

    print("KERNEL_OK")
</pallas_src>

<mosaic_0001>
module attributes {stable_mosaic.version = 11 : i64} {
  func.func @_mlp_kernel(%arg0: i32, %arg1: memref<2x784xf32, #tpu.memory_space<vmem>>, %arg2: memref<784x57xf32, #tpu.memory_space<vmem>>, %arg3: memref<1x57xf32, #tpu.memory_space<vmem>>, %arg4: memref<57x12xf32, #tpu.memory_space<vmem>>, %arg5: memref<12x10xf32, #tpu.memory_space<vmem>>, %arg6: memref<1x10xf32, #tpu.memory_space<vmem>>, %arg7: memref<2x10xf32, #tpu.memory_space<vmem>>) attributes {dimension_semantics = [#tpu.dimension_semantics<parallel>], iteration_bounds = array<i64: 1>, scalar_prefetch = 0 : i64, scratch_operands = 0 : i64, tpu.core_type = #tpu.core_type<tc>, window_params = [{transform_indices = @transform_0, window_bounds = array<i64: 2, 784>}, {pipeline_mode = #tpu.pipeline_mode<synchronous>, transform_indices = @transform_1, window_bounds = array<i64: 784, 57>}, {pipeline_mode = #tpu.pipeline_mode<synchronous>, transform_indices = @transform_2, window_bounds = array<i64: 1, 57>}, {pipeline_mode = #tpu.pipeline_mode<synchronous>, transform_indices = @transform_3, window_bounds = array<i64: 57, 12>}, {pipeline_mode = #tpu.pipeline_mode<synchronous>, transform_indices = @transform_4, window_bounds = array<i64: 12, 10>}, {pipeline_mode = #tpu.pipeline_mode<synchronous>, transform_indices = @transform_5, window_bounds = array<i64: 1, 10>}, {transform_indices = @transform_6, window_bounds = array<i64: 2, 10>}]} {
    %c0 = arith.constant 0 : index
    %c0_0 = arith.constant 0 : index
    %0 = vector.load %arg1[%c0, %c0_0] : memref<2x784xf32, #tpu.memory_space<vmem>>, vector<2x784xf32>
    %c0_1 = arith.constant 0 : index
    %c0_2 = arith.constant 0 : index
    %1 = vector.load %arg2[%c0_1, %c0_2] : memref<784x57xf32, #tpu.memory_space<vmem>>, vector<784x57xf32>
    %cst = arith.constant dense<0.000000e+00> : vector<2x57xf32>
    %2 = tpu.matmul %0, %1, %cst {dimension_numbers = #tpu.dot_dimension_numbers<[1], [0], [0], [1], [0, 0, 1, 1], [], []>} : vector<2x784xf32>, vector<784x57xf32>, vector<2x57xf32> -> vector<2x57xf32>
    %c0_3 = arith.constant 0 : index
    %c0_4 = arith.constant 0 : index
    %3 = vector.load %arg3[%c0_3, %c0_4] : memref<1x57xf32, #tpu.memory_space<vmem>>, vector<1x57xf32>
    %4 = vector.broadcast %3 : vector<1x57xf32> to vector<2x57xf32>
    %5 = arith.addf %2, %4 : vector<2x57xf32>
    %cst_5 = arith.constant 0.000000e+00 : f32
    %6 = vector.broadcast %cst_5 : f32 to vector<2x57xf32>
    %7 = arith.cmpf ogt, %5, %6 : vector<2x57xf32>
    %8 = math.exp %5 : vector<2x57xf32>
    %cst_6 = arith.constant 1.000000e+00 : f32
    %9 = vector.broadcast %cst_6 : f32 to vector<2x57xf32>
    %10 = arith.subf %8, %9 : vector<2x57xf32>
    %cst_7 = arith.constant 1.67326319 : f32
    %11 = vector.broadcast %cst_7 : f32 to vector<2x57xf32>
    %12 = arith.mulf %11, %10 : vector<2x57xf32>
    %13 = arith.select %7, %5, %12 : vector<2x57xi1>, vector<2x57xf32>
    %cst_8 = arith.constant 1.05070102 : f32
    %14 = vector.broadcast %cst_8 : f32 to vector<2x57xf32>
    %15 = arith.mulf %14, %13 : vector<2x57xf32>
    %c0_9 = arith.constant 0 : index
    %c0_10 = arith.constant 0 : index
    %16 = vector.load %arg4[%c0_9, %c0_10] : memref<57x12xf32, #tpu.memory_space<vmem>>, vector<57x12xf32>
    %cst_11 = arith.constant dense<0.000000e+00> : vector<2x12xf32>
    %17 = tpu.matmul %15, %16, %cst_11 {dimension_numbers = #tpu.dot_dimension_numbers<[1], [0], [0], [1], [0, 0, 1, 1], [], []>} : vector<2x57xf32>, vector<57x12xf32>, vector<2x12xf32> -> vector<2x12xf32>
    %cst_12 = arith.constant 0.000000e+00 : f32
    %18 = vector.broadcast %cst_12 : f32 to vector<2x12xf32>
    %19 = arith.cmpf ogt, %17, %18 : vector<2x12xf32>
    %20 = math.exp %17 : vector<2x12xf32>
    %cst_13 = arith.constant 1.000000e+00 : f32
    %21 = vector.broadcast %cst_13 : f32 to vector<2x12xf32>
    %22 = arith.subf %20, %21 : vector<2x12xf32>
    %cst_14 = arith.constant 1.67326319 : f32
    %23 = vector.broadcast %cst_14 : f32 to vector<2x12xf32>
    %24 = arith.mulf %23, %22 : vector<2x12xf32>
    %25 = arith.select %19, %17, %24 : vector<2x12xi1>, vector<2x12xf32>
    %cst_15 = arith.constant 1.05070102 : f32
    %26 = vector.broadcast %cst_15 : f32 to vector<2x12xf32>
    %27 = arith.mulf %26, %25 : vector<2x12xf32>
    %c0_16 = arith.constant 0 : index
    %c0_17 = arith.constant 0 : index
    %28 = vector.load %arg5[%c0_16, %c0_17] : memref<12x10xf32, #tpu.memory_space<vmem>>, vector<12x10xf32>
    %cst_18 = arith.constant dense<0.000000e+00> : vector<2x10xf32>
    %29 = tpu.matmul %27, %28, %cst_18 {dimension_numbers = #tpu.dot_dimension_numbers<[1], [0], [0], [1], [0, 0, 1, 1], [], []>} : vector<2x12xf32>, vector<12x10xf32>, vector<2x10xf32> -> vector<2x10xf32>
    %c0_19 = arith.constant 0 : index
    %c0_20 = arith.constant 0 : index
    %30 = vector.load %arg6[%c0_19, %c0_20] : memref<1x10xf32, #tpu.memory_space<vmem>>, vector<1x10xf32>
    %31 = vector.broadcast %30 : vector<1x10xf32> to vector<2x10xf32>
    %32 = arith.addf %29, %31 : vector<2x10xf32>
    %cst_21 = arith.constant dense<0xFF800000> : vector<2xf32>
    %33 = vector.multi_reduction <maximumf>, %32, %cst_21 [1] : vector<2x10xf32> to vector<2xf32>
    %34 = vector.shape_cast %33 : vector<2xf32> to vector<2x1xf32>
    %35 = vector.broadcast %34 : vector<2x1xf32> to vector<2x10xf32>
    %36 = arith.subf %32, %35 : vector<2x10xf32>
    %37 = math.exp %36 : vector<2x10xf32>
    %cst_22 = arith.constant dense<0.000000e+00> : vector<2xf32>
    %38 = vector.multi_reduction <add>, %37, %cst_22 [1] : vector<2x10xf32> to vector<2xf32>
    %39 = vector.shape_cast %38 : vector<2xf32> to vector<2x1xf32>
    %40 = math.log %39 : vector<2x1xf32>
    %41 = vector.broadcast %40 : vector<2x1xf32> to vector<2x10xf32>
    %42 = arith.subf %36, %41 : vector<2x10xf32>
    %c0_23 = arith.constant 0 : index
    %c0_24 = arith.constant 0 : index
    %43 = vector.load %arg7[%c0_23, %c0_24] : memref<2x10xf32, #tpu.memory_space<vmem>>, vector<2x10xf32>
    tpu.vector_store %arg7[%c0_23, %c0_24], %42 {strides = array<i32>} : memref<2x10xf32, #tpu.memory_space<vmem>>, vector<2x10xf32>,
    return
  }
  func.func @transform_0(%arg0: i32) -> (i32, i32) {
    %c0_i32 = arith.constant 0 : i32
    %c0_i32_0 = arith.constant 0 : i32
    return %arg0, %c0_i32 : i32, i32
  }
  func.func @transform_1(%arg0: i32) -> (i32, i32) {
    %c0_i32 = arith.constant 0 : i32
    %c0_i32_0 = arith.constant 0 : i32
    %c0_i32_1 = arith.constant 0 : i32
    return %c0_i32, %c0_i32_0 : i32, i32
  }
  func.func @transform_2(%arg0: i32) -> (i32, i32) {
    %c0_i32 = arith.constant 0 : i32
    %c0_i32_0 = arith.constant 0 : i32
    %c0_i32_1 = arith.constant 0 : i32
    return %c0_i32, %c0_i32_0 : i32, i32
  }
  func.func @transform_3(%arg0: i32) -> (i32, i32) {
    %c0_i32 = arith.constant 0 : i32
    %c0_i32_0 = arith.constant 0 : i32
    %c0_i32_1 = arith.constant 0 : i32
    return %c0_i32, %c0_i32_0 : i32, i32
  }
  func.func @transform_4(%arg0: i32) -> (i32, i32) {
    %c0_i32 = arith.constant 0 : i32
    %c0_i32_0 = arith.constant 0 : i32
    %c0_i32_1 = arith.constant 0 : i32
    return %c0_i32, %c0_i32_0 : i32, i32
  }
  func.func @transform_5(%arg0: i32) -> (i32, i32) {
    %c0_i32 = arith.constant 0 : i32
    %c0_i32_0 = arith.constant 0 : i32
    %c0_i32_1 = arith.constant 0 : i32
    return %c0_i32, %c0_i32_0 : i32, i32
  }
  func.func @transform_6(%arg0: i32) -> (i32, i32) {
    %c0_i32 = arith.constant 0 : i32
    %c0_i32_0 = arith.constant 0 : i32
    return %arg0, %c0_i32 : i32, i32
  }
}

</mosaic_0001>

<llo_original>
// kernel: linear_selu_12_forward.1
$region0: #{linear_selu_12_forward.1}
  #allocation0 [shape = 'u32[]', space=smem, size = 0x4, offset = 0x4, fixed_abs, tag = 'smem constant byte address 0x4 - core index']
  #allocation1 [shape = 'u32[144,128]{1,0:T(1,128)}', space=vmem, size = 0x12000, scoped, tag = 'internal scratch']
  %s0 = inlined_call_operand.vmem [shape: f32[2,784], index: 0, kind: input, shape index: {}]
  %s1 = inlined_call_operand.vmem [shape: f32[784,57], index: 1, kind: input, shape index: {}]
  %s2 = inlined_call_operand.vmem [shape: f32[1,57], index: 2, kind: input, shape index: {}]
  %s3 = inlined_call_operand.vmem [shape: f32[57,12], index: 3, kind: input, shape index: {}]
  %s4 = inlined_call_operand.vmem [shape: f32[12,10], index: 4, kind: input, shape index: {}]
  %s5 = inlined_call_operand.vmem [shape: f32[1,10], index: 5, kind: input, shape index: {}]
  %s6 = inlined_call_operand.hbm [shape: f32[2,10], index: 6, kind: output, shape index: {}]
  %s7 = sld [smem:[#allocation0]]
  $region34: #{linear_selu_12_forward.1} parent=0
    _
  %s9 = ssub.s32 1, %s7
  %s10 = scalar_select 0, %s9, %s7
  $region1: #{linear_selu_12_forward.1} parent=0
    #allocation2 [shape = 'u8[1024]{0}', space=vmem, size = 0x400, scoped, tag = 'output window, operand 0, single buffered']
    #allocation3 [shape = 's32[1]{0}', space=sflag, size = 0x4, scoped, tag = 'scoped memory for linear_selu_12_forward.1']
    %11 = vsyncpa [#allocation3], 0
    // Predicated region
    $region2: #{linear_selu_12_forward.1} parent=1 // pred_check
      _
    $region3: #{linear_selu_12_forward.1} parent=1 // pred_check_branch
      %13 = sbr.rel (0) target = $region5
    $region4: #{linear_selu_12_forward.1} parent=1 // pred_region
      _
    $region5: #{linear_selu_12_forward.1} parent=1 // pred_fallthru
      _
    // Predicated region
    $region6: #{linear_selu_12_forward.1} parent=1 // pred_check
      _
    $region7: #{linear_selu_12_forward.1} parent=1 // pred_check_branch
      %15 = sbr.rel (0) target = $region9
    $region8: #{linear_selu_12_forward.1} parent=1 // pred_region
      _
    $region9: #{linear_selu_12_forward.1} parent=1 // pred_fallthru
      _
    // Predicated region
    $region10: #{linear_selu_12_forward.1} parent=1 // pred_check
      _
    $region11: #{linear_selu_12_forward.1} parent=1 // pred_check_branch
      %17 = sbr.rel (0) target = $region13
    $region12: #{linear_selu_12_forward.1} parent=1 // pred_region
      _
    $region13: #{linear_selu_12_forward.1} parent=1 // pred_fallthru
      _
    // Predicated region
    $region14: #{linear_selu_12_forward.1} parent=1 // pred_check
      _
    $region15: #{linear_selu_12_forward.1} parent=1 // pred_check_branch
      %19 = sbr.rel (0) target = $region17
    $region16: #{linear_selu_12_forward.1} parent=1 // pred_region
      _
    $region17: #{linear_selu_12_forward.1} parent=1 // pred_fallthru
      _
    // Predicated region
    $region18: #{linear_selu_12_forward.1} parent=1 // pred_check
      _
    $region19: #{linear_selu_12_forward.1} parent=1 // pred_check_branch
      %21 = sbr.rel (0) target = $region21
    $region20: #{linear_selu_12_forward.1} parent=1 // pred_region
      _
    $region21: #{linear_selu_12_forward.1} parent=1 // pred_fallthru
      _
    // Predicated region
    $region22: #{linear_selu_12_forward.1} parent=1 // pred_check
      _
    $region23: #{linear_selu_12_forward.1} parent=1 // pred_check_branch
      %23 = sbr.rel (0) target = $region25
    $region24: #{linear_selu_12_forward.1} parent=1 // pred_region
      _
    $region25: #{linear_selu_12_forward.1} parent=1 // pred_fallthru
      _
    %v24 = vld [vmem:[%s0] sm:$0xff]
    %v25 = vld [vmem:[%s0 + $0x8] sm:$0x3f]
    %v26 = vld [vmem:[%s1] sm:$0xff]
    %v27 = vld [vmem:[%s1 + $0x8] sm:$0xff]
    %v28 = vld [vmem:[%s1 + $0x10] sm:$0xff]
    %v29 = vld [vmem:[%s1 + $0x18] sm:$0xff]
    %v30 = vld [vmem:[%s1 + $0x20] sm:$0xff]
    %v31 = vld [vmem:[%s1 + $0x28] sm:$0xff]
    %v32 = vld [vmem:[%s1 + $0x30] sm:$0xff]
    %v33 = vld [vmem:[%s1 + $0x38] sm:$0xff]
    %v34 = vld [vmem:[%s1 + $0x40] sm:$0xff]
    %v35 = vld [vmem:[%s1 + $0x48] sm:$0xff]
    %v36 = vld [vmem:[%s1 + $0x50] sm:$0xff]
    %v37 = vld [vmem:[%s1 + $0x58] sm:$0xff]
    %v38 = vld [vmem:[%s1 + $0x60] sm:$0xff]
    %v39 = vld [vmem:[%s1 + $0x68] sm:$0xff]
    %v40 = vld [vmem:[%s1 + $0x70] sm:$0xff]
    %v41 = vld [vmem:[%s1 + $0x78] sm:$0xff]
    %v42 = vld [vmem:[%s1 + $0x80] sm:$0xff]
    %v43 = vld [vmem:[%s1 + $0x88] sm:$0xff]
    %v44 = vld [vmem:[%s1 + $0x90] sm:$0xff]
    %v45 = vld [vmem:[%s1 + $0x98] sm:$0xff]
    %v46 = vld [vmem:[%s1 + $0xa0] sm:$0xff]
    %v47 = vld [vmem:[%s1 + $0xa8] sm:$0xff]
    %v48 = vld [vmem:[%s1 + $0xb0] sm:$0xff]
    %v49 = vld [vmem:[%s1 + $0xb8] sm:$0xff]
    %v50 = vld [vmem:[%s1 + $0xc0] sm:$0xff]
    %v51 = vld [vmem:[%s1 + $0xc8] sm:$0xff]
    %v52 = vld [vmem:[%s1 + $0xd0] sm:$0xff]
    %v53 = vld [vmem:[%s1 + $0xd8] sm:$0xff]
    %v54 = vld [vmem:[%s1 + $0xe0] sm:$0xff]
    %v55 = vld [vmem:[%s1 + $0xe8] sm:$0xff]
    %v56 = vld [vmem:[%s1 + $0xf0] sm:$0xff]
    %v57 = vld [vmem:[%s1 + $0xf8] sm:$0xff]
    %v58 = vld [vmem:[%s1 + $0x100] sm:$0xff]
    %v59 = vld [vmem:[%s1 + $0x108] sm:$0xff]
    %v60 = vld [vmem:[%s1 + $0x110] sm:$0xff]
    %v61 = vld [vmem:[%s1 + $0x118] sm:$0xff]
    %v62 = vld [vmem:[%s1 + $0x120] sm:$0xff]
    %v63 = vld [vmem:[%s1 + $0x128] sm:$0xff]
    %v64 = vld [vmem:[%s1 + $0x130] sm:$0xff]
    %v65 = vld [vmem:[%s1 + $0x138] sm:$0xff]
    %v66 = vld [vmem:[%s1 + $0x140] sm:$0xff]
    %v67 = vld [vmem:[%s1 + $0x148] sm:$0xff]
    %v68 = vld [vmem:[%s1 + $0x150] sm:$0xff]
    %v69 = vld [vmem:[%s1 + $0x158] sm:$0xff]
    %v70 = vld [vmem:[%s1 + $0x160] sm:$0xff]
    %v71 = vld [vmem:[%s1 + $0x168] sm:$0xff]
    %v72 = vld [vmem:[%s1 + $0x170] sm:$0xff]
    %v73 = vld [vmem:[%s1 + $0x178] sm:$0xff]
    %v74 = vld [vmem:[%s1 + $0x180] sm:$0xff]
    %v75 = vld [vmem:[%s1 + $0x188] sm:$0xff]
    %v76 = vld [vmem:[%s1 + $0x190] sm:$0xff]
    %v77 = vld [vmem:[%s1 + $0x198] sm:$0xff]
    %v78 = vld [vmem:[%s1 + $0x1a0] sm:$0xff]
    %v79 = vld [vmem:[%s1 + $0x1a8] sm:$0xff]
    %v80 = vld [vmem:[%s1 + $0x1b0] sm:$0xff]
    %v81 = vld [vmem:[%s1 + $0x1b8] sm:$0xff]
    %v82 = vld [vmem:[%s1 + $0x1c0] sm:$0xff]
    %v83 = vld [vmem:[%s1 + $0x1c8] sm:$0xff]
    %v84 = vld [vmem:[%s1 + $0x1d0] sm:$0xff]
    %v85 = vld [vmem:[%s1 + $0x1d8] sm:$0xff]
    %v86 = vld [vmem:[%s1 + $0x1e0] sm:$0xff]
    %v87 = vld [vmem:[%s1 + $0x1e8] sm:$0xff]
    %v88 = vld [vmem:[%s1 + $0x1f0] sm:$0xff]
    %v89 = vld [vmem:[%s1 + $0x1f8] sm:$0xff]
    %v90 = vld [vmem:[%s1 + $0x200] sm:$0xff]
    %v91 = vld [vmem:[%s1 + $0x208] sm:$0xff]
    %v92 = vld [vmem:[%s1 + $0x210] sm:$0xff]
    %v93 = vld [vmem:[%s1 + $0x218] sm:$0xff]
    %v94 = vld [vmem:[%s1 + $0x220] sm:$0xff]
    %v95 = vld [vmem:[%s1 + $0x228] sm:$0xff]
    %v96 = vld [vmem:[%s1 + $0x230] sm:$0xff]
    %v97 = vld [vmem:[%s1 + $0x238] sm:$0xff]
    %v98 = vld [vmem:[%s1 + $0x240] sm:$0xff]
    %v99 = vld [vmem:[%s1 + $0x248] sm:$0xff]
    %v100 = vld [vmem:[%s1 + $0x250] sm:$0xff]
    %v101 = vld [vmem:[%s1 + $0x258] sm:$0xff]
    %v102 = vld [vmem:[%s1 + $0x260] sm:$0xff]
    %v103 = vld [vmem:[%s1 + $0x268] sm:$0xff]
    %v104 = vld [vmem:[%s1 + $0x270] sm:$0xff]
    %v105 = vld [vmem:[%s1 + $0x278] sm:$0xff]
    %v106 = vld [vmem:[%s1 + $0x280] sm:$0xff]
    %v107 = vld [vmem:[%s1 + $0x288] sm:$0xff]
    %v108 = vld [vmem:[%s1 + $0x290] sm:$0xff]
    %v109 = vld [vmem:[%s1 + $0x298] sm:$0xff]
    %v110 = vld [vmem:[%s1 + $0x2a0] sm:$0xff]
    %v111 = vld [vmem:[%s1 + $0x2a8] sm:$0xff]
    %v112 = vld [vmem:[%s1 + $0x2b0] sm:$0xff]
    %v113 = vld [vmem:[%s1 + $0x2b8] sm:$0xff]
    %v114 = vld [vmem:[%s1 + $0x2c0] sm:$0xff]
    %v115 = vld [vmem:[%s1 + $0x2c8] sm:$0xff]
    %v116 = vld [vmem:[%s1 + $0x2d0] sm:$0xff]
    %v117 = vld [vmem:[%s1 + $0x2d8] sm:$0xff]
    %v118 = vld [vmem:[%s1 + $0x2e0] sm:$0xff]
    %v119 = vld [vmem:[%s1 + $0x2e8] sm:$0xff]
    %v120 = vld [vmem:[%s1 + $0x2f0] sm:$0xff]
    %v121 = vld [vmem:[%s1 + $0x2f8] sm:$0xff]
    %v122 = vld [vmem:[%s1 + $0x300] sm:$0xff]
    %v123 = vld [vmem:[%s1 + $0x308] sm:$0xff]
    %v124 = vld [vmem:[%s2] sm:$0x1]
    %v126 = vlaneseq
    %v127 = vshrl.u32 %v126, 7
    %v128 = vsub.s32 0, %v127
    %v129 = vrot.slane %v124, %v128
    %v133 = vcombine.high %v24, %v24
    %v135 = vunpack.c.l.s4 1983009808
    %v136 = vunpack.c.0.s8 %v135
    %v137 = vlaneseq
    %v138 = vshrl.u32 %v137, 7
    %v139 = vsub.s32 %v136, %v138
    %v140 = vrot.slane %v24, %v139
    %v142 = vunpack.c.l.s4 1983009808
    %v143 = vunpack.c.0.s8 %v142
    %v144 = vlaneseq
    %v145 = vshrl.u32 %v144, 7
    %v146 = vsub.s32 %v143, %v145
    %v147 = vrot.slane %v133, %v146
    %v148 = vcombine.high %v140, %v140
    %v149 = vcombine.high %v147, %v147
    %v150 = vcombine.high %v25, %v25
    %v152 = vunpack.c.l.s4 1983009808
    %v153 = vunpack.c.0.s8 %v152
    %v154 = vlaneseq
    %v155 = vshrl.u32 %v154, 7
    %v156 = vsub.s32 %v153, %v155
    %v157 = vrot.slane %v25, %v156
    %v159 = vunpack.c.l.s4 1983009808
    %v160 = vunpack.c.0.s8 %v159
    %v161 = vlaneseq
    %v162 = vshrl.u32 %v161, 7
    %v163 = vsub.s32 %v160, %v162
    %v164 = vrot.slane %v150, %v163
    %v165 = vcombine.high %v157, %v157
    %vm172 = vcmask 130048
    %v173 = vsel %vm172, %v164, 0
    %175 = vmatprep.subr.mxu0 0.0
    %176 = vmatpush1.msra.mxu0 %v26
    %177 = vmatprep.subr.mxu0 0.0
    %178 = vmatpush1.msra.mxu0 %v27
    %179 = vmatprep.subr.mxu0 0.0
    %180 = vmatpush1.msra.mxu0 %v28
    %181 = vmatprep.subr.mxu0 0.0
    %182 = vmatpush1.msra.mxu0 %v29
    %183 = vmatprep.subr.mxu0 0.0
    %184 = vmatpush1.msra.mxu0 %v30
    %185 = vmatprep.subr.mxu0 0.0
    %186 = vmatpush1.msra.mxu0 %v31
    %187 = vmatprep.subr.mxu0 0.0
    %188 = vmatpush1.msra.mxu0 %v32
    %189 = vmatprep.subr.mxu0 0.0
    %190 = vmatpush1.msra.mxu0 %v33
    %191 = vmatprep.subr.mxu0 0.0
    %192 = vmatpush1.msra.mxu0 %v34
    %193 = vmatprep.subr.mxu0 0.0
    %194 = vmatpush1.msra.mxu0 %v35
    %195 = vmatprep.subr.mxu0 0.0
    %196 = vmatpush1.msra.mxu0 %v36
    %197 = vmatprep.subr.mxu0 0.0
    %198 = vmatpush1.msra.mxu0 %v37
    %199 = vmatprep.subr.mxu0 0.0
    %200 = vmatpush1.msra.mxu0 %v38
    %201 = vmatprep.subr.mxu0 0.0
    %202 = vmatpush1.msra.mxu0 %v39
    %203 = vmatprep.subr.mxu0 0.0
    %204 = vmatpush1.msra.mxu0 %v40
    %205 = vmatprep.subr.mxu0 0.0
    %206 = vmatpush1.msra.mxu0 %v41
    %207 = vmatprep.subr.mxu0 0.0
    %208 = vmatpush1.msra.mxu0 %v42
    %209 = vmatprep.subr.mxu0 0.0
    %210 = vmatpush1.msra.mxu0 %v43
    %211 = vmatprep.subr.mxu0 0.0
    %212 = vmatpush1.msra.mxu0 %v44
    %213 = vmatprep.subr.mxu0 0.0
    %214 = vmatpush1.msra.mxu0 %v45
    %215 = vmatprep.subr.mxu0 0.0
    %216 = vmatpush1.msra.mxu0 %v46
    %217 = vmatprep.subr.mxu0 0.0
    %218 = vmatpush1.msra.mxu0 %v47
    %219 = vmatprep.subr.mxu0 0.0
    %220 = vmatpush1.msra.mxu0 %v48
    %221 = vmatprep.subr.mxu0 0.0
    %222 = vmatpush1.msra.mxu0 %v49
    %223 = vmatprep.subr.mxu0 0.0
    %224 = vmatpush1.msra.mxu0 %v50
    %225 = vmatprep.subr.mxu0 0.0
    %226 = vmatpush1.msra.mxu0 %v51
    %227 = vmatprep.subr.mxu0 0.0
    %228 = vmatpush1.msra.mxu0 %v52
    %229 = vmatprep.subr.mxu0 0.0
    %230 = vmatpush1.msra.mxu0 %v53
    %231 = vmatprep.subr.mxu0 0.0
    %232 = vmatpush1.msra.mxu0 %v54
    %233 = vmatprep.subr.mxu0 0.0
    %234 = vmatpush1.msra.mxu0 %v55
    %235 = vmatprep.subr.mxu0 0.0
    %236 = vmatpush1.msra.mxu0 %v56
    %237 = vmatprep.subr.mxu0 0.0
    %238 = vmatpush1.msra.mxu0 %v57
    %239 = vmatprep.mubr.f32.mxu0 %v148
    %240 = vmatmul.mubr.f32.gmra.mrb[0].mxu0 %v140
    %v241 = vpop.f32.mrb[0].mxu0
    %v242 = vadd.f32 %v129, %v241
    %v243 = vpop.f32.mrb[0].mxu0
    %244 = vdwg.mxu0
    %245 = vmatprep.subr.mxu0 0.0
    %246 = vmatpush1.msra.mxu0 %v58
    %247 = vmatprep.subr.mxu0 0.0
    %248 = vmatpush1.msra.mxu0 %v59
    %249 = vmatprep.subr.mxu0 0.0
    %250 = vmatpush1.msra.mxu0 %v60
    %251 = vmatprep.subr.mxu0 0.0
    %252 = vmatpush1.msra.mxu0 %v61
    %253 = vmatprep.subr.mxu0 0.0
    %254 = vmatpush1.msra.mxu0 %v62
    %255 = vmatprep.subr.mxu0 0.0
    %256 = vmatpush1.msra.mxu0 %v63
    %257 = vmatprep.subr.mxu0 0.0
    %258 = vmatpush1.msra.mxu0 %v64
    %259 = vmatprep.subr.mxu0 0.0
    %260 = vmatpush1.msra.mxu0 %v65
    %261 = vmatprep.subr.mxu0 0.0
    %262 = vmatpush1.msra.mxu0 %v66
    %263 = vmatprep.subr.mxu0 0.0
    %264 = vmatpush1.msra.mxu0 %v67
    %265 = vmatprep.subr.mxu0 0.0
    %266 = vmatpush1.msra.mxu0 %v68
    %267 = vmatprep.subr.mxu0 0.0
    %268 = vmatpush1.msra.mxu0 %v69
    %269 = vmatprep.subr.mxu0 0.0
    %270 = vmatpush1.msra.mxu0 %v70
    %271 = vmatprep.subr.mxu0 0.0
    %272 = vmatpush1.msra.mxu0 %v71
    %273 = vmatprep.subr.mxu0 0.0
    %274 = vmatpush1.msra.mxu0 %v72
    %275 = vmatprep.subr.mxu0 0.0
    %276 = vmatpush1.msra.mxu0 %v73
    %277 = vmatprep.subr.mxu0 0.0
    %278 = vmatpush1.msra.mxu0 %v74
    %279 = vmatprep.subr.mxu0 0.0
    %280 = vmatpush1.msra.mxu0 %v75
    %281 = vmatprep.subr.mxu0 0.0
    %282 = vmatpush1.msra.mxu0 %v76
    %283 = vmatprep.subr.mxu0 0.0
    %284 = vmatpush1.msra.mxu0 %v77
    %285 = vmatprep.subr.mxu0 0.0
    %286 = vmatpush1.msra.mxu0 %v78
    %287 = vmatprep.subr.mxu0 0.0
    %288 = vmatpush1.msra.mxu0 %v79
    %289 = vmatprep.subr.mxu0 0.0
    %290 = vmatpush1.msra.mxu0 %v80
    %291 = vmatprep.subr.mxu0 0.0
    %292 = vmatpush1.msra.mxu0 %v81
    %293 = vmatprep.subr.mxu0 0.0
    %294 = vmatpush1.msra.mxu0 %v82
    %295 = vmatprep.subr.mxu0 0.0
    %296 = vmatpush1.msra.mxu0 %v83
    %297 = vmatprep.subr.mxu0 0.0
    %298 = vmatpush1.msra.mxu0 %v84
    %299 = vmatprep.subr.mxu0 0.0
    %300 = vmatpush1.msra.mxu0 %v85
    %301 = vmatprep.subr.mxu0 0.0
    %302 = vmatpush1.msra.mxu0 %v86
    %303 = vmatprep.subr.mxu0 0.0
    %304 = vmatpush1.msra.mxu0 %v87
    %305 = vmatprep.subr.mxu0 0.0
    %306 = vmatpush1.msra.mxu0 %v88
    %307 = vmatprep.subr.mxu0 0.0
    %308 = vmatpush1.msra.mxu0 %v89
    %309 = vmatprep.mubr.f32.mxu0 %v149
    %310 = vmatmul.mubr.f32.gmra.mrb[0].mxu0 %v147
    %v311 = vpop.f32.mrb[0].mxu0
    %v312 = vadd.f32 %v242, %v311
    %v313 = vpop.f32.mrb[0].mxu0
    %314 = vdwg.mxu0
    %315 = vmatprep.subr.mxu0 0.0
    %316 = vmatpush1.msra.mxu0 %v90
    %317 = vmatprep.subr.mxu0 0.0
    %318 = vmatpush1.msra.mxu0 %v91
    %319 = vmatprep.subr.mxu0 0.0
    %320 = vmatpush1.msra.mxu0 %v92
    %321 = vmatprep.subr.mxu0 0.0
    %322 = vmatpush1.msra.mxu0 %v93
    %323 = vmatprep.subr.mxu0 0.0
    %324 = vmatpush1.msra.mxu0 %v94
    %325 = vmatprep.subr.mxu0 0.0
    %326 = vmatpush1.msra.mxu0 %v95
    %327 = vmatprep.subr.mxu0 0.0
    %328 = vmatpush1.msra.mxu0 %v96
    %329 = vmatprep.subr.mxu0 0.0
    %330 = vmatpush1.msra.mxu0 %v97
    %331 = vmatprep.subr.mxu0 0.0
    %332 = vmatpush1.msra.mxu0 %v98
    %333 = vmatprep.subr.mxu0 0.0
    %334 = vmatpush1.msra.mxu0 %v99
    %335 = vmatprep.subr.mxu0 0.0
    %336 = vmatpush1.msra.mxu0 %v100
    %337 = vmatprep.subr.mxu0 0.0
    %338 = vmatpush1.msra.mxu0 %v101
    %339 = vmatprep.subr.mxu0 0.0
    %340 = vmatpush1.msra.mxu0 %v102
    %341 = vmatprep.subr.mxu0 0.0
    %342 = vmatpush1.msra.mxu0 %v103
    %343 = vmatprep.subr.mxu0 0.0
    %344 = vmatpush1.msra.mxu0 %v104
    %345 = vmatprep.subr.mxu0 0.0
    %346 = vmatpush1.msra.mxu0 %v105
    %347 = vmatprep.subr.mxu0 0.0
    %348 = vmatpush1.msra.mxu0 %v106
    %349 = vmatprep.subr.mxu0 0.0
    %350 = vmatpush1.msra.mxu0 %v107
    %351 = vmatprep.subr.mxu0 0.0
    %352 = vmatpush1.msra.mxu0 %v108
    %353 = vmatprep.subr.mxu0 0.0
    %354 = vmatpush1.msra.mxu0 %v109
    %355 = vmatprep.subr.mxu0 0.0
    %356 = vmatpush1.msra.mxu0 %v110
    %357 = vmatprep.subr.mxu0 0.0
    %358 = vmatpush1.msra.mxu0 %v111
    %359 = vmatprep.subr.mxu0 0.0
    %360 = vmatpush1.msra.mxu0 %v112
    %361 = vmatprep.subr.mxu0 0.0
    %362 = vmatpush1.msra.mxu0 %v113
    %363 = vmatprep.subr.mxu0 0.0
    %364 = vmatpush1.msra.mxu0 %v114
    %365 = vmatprep.subr.mxu0 0.0
    %366 = vmatpush1.msra.mxu0 %v115
    %367 = vmatprep.subr.mxu0 0.0
    %368 = vmatpush1.msra.mxu0 %v116
    %369 = vmatprep.subr.mxu0 0.0
    %370 = vmatpush1.msra.mxu0 %v117
    %371 = vmatprep.subr.mxu0 0.0
    %372 = vmatpush1.msra.mxu0 %v118
    %373 = vmatprep.subr.mxu0 0.0
    %374 = vmatpush1.msra.mxu0 %v119
    %375 = vmatprep.subr.mxu0 0.0
    %376 = vmatpush1.msra.mxu0 %v120
    %377 = vmatprep.subr.mxu0 0.0
    %378 = vmatpush1.msra.mxu0 %v121
    %379 = vmatprep.mubr.f32.mxu0 %v165
    %380 = vmatmul.mubr.f32.gmra.mrb[0].mxu0 %v157
    %v381 = vpop.f32.mrb[0].mxu0
    %v382 = vadd.f32 %v312, %v381
    %v383 = vpop.f32.mrb[0].mxu0
    %384 = vdwg.mxu0
    %385 = vmatprep.subr.mxu0 0.0
    %386 = vmatpush1.msra.mxu0 %v122
    %387 = vmatprep.subr.mxu0 0.0
    %388 = vmatpush1.msra.mxu0 %v123
    %389 = vmatprep.subr.mxu0 0.0
    %390 = vmatpush1.msra.mxu0 0.0
    %391 = vmatprep.subr.mxu0 0.0
    %392 = vmatpush1.msra.mxu0 0.0
    %393 = vmatprep.subr.mxu0 0.0
    %394 = vmatpush1.msra.mxu0 0.0
    %395 = vmatprep.subr.mxu0 0.0
    %396 = vmatpush1.msra.mxu0 0.0
    %397 = vmatprep.subr.mxu0 0.0
    %398 = vmatpush1.msra.mxu0 0.0
    %399 = vmatprep.subr.mxu0 0.0
    %400 = vmatpush1.msra.mxu0 0.0
    %401 = vmatprep.subr.mxu0 0.0
    %402 = vmatpush1.msra.mxu0 0.0
    %403 = vmatprep.subr.mxu0 0.0
    %404 = vmatpush1.msra.mxu0 0.0
    %405 = vmatprep.subr.mxu0 0.0
    %406 = vmatpush1.msra.mxu0 0.0
    %407 = vmatprep.subr.mxu0 0.0
    %408 = vmatpush1.msra.mxu0 0.0
    %409 = vmatprep.subr.mxu0 0.0
    %410 = vmatpush1.msra.mxu0 0.0
    %411 = vmatprep.subr.mxu0 0.0
    %412 = vmatpush1.msra.mxu0 0.0
    %413 = vmatprep.subr.mxu0 0.0
    %414 = vmatpush1.msra.mxu0 0.0
    %415 = vmatprep.subr.mxu0 0.0
    %416 = vmatpush1.msra.mxu0 0.0
    %417 = vmatprep.subr.mxu0 0.0
    %418 = vmatpush1.msra.mxu0 0.0
    %419 = vmatprep.subr.mxu0 0.0
    %420 = vmatpush1.msra.mxu0 0.0
    %421 = vmatprep.subr.mxu0 0.0
    %422 = vmatpush1.msra.mxu0 0.0
    %423 = vmatprep.subr.mxu0 0.0
    %424 = vmatpush1.msra.mxu0 0.0
    %425 = vmatprep.subr.mxu0 0.0
    %426 = vmatpush1.msra.mxu0 0.0
    %427 = vmatprep.subr.mxu0 0.0
    %428 = vmatpush1.msra.mxu0 0.0
    %429 = vmatprep.subr.mxu0 0.0
    %430 = vmatpush1.msra.mxu0 0.0
    %431 = vmatprep.subr.mxu0 0.0
    %432 = vmatpush1.msra.mxu0 0.0
    %433 = vmatprep.subr.mxu0 0.0
    %434 = vmatpush1.msra.mxu0 0.0
    %435 = vmatprep.subr.mxu0 0.0
    %436 = vmatpush1.msra.mxu0 0.0
    %437 = vmatprep.subr.mxu0 0.0
    %438 = vmatpush1.msra.mxu0 0.0
    %439 = vmatprep.subr.mxu0 0.0
    %440 = vmatpush1.msra.mxu0 0.0
    %441 = vmatprep.subr.mxu0 0.0
    %442 = vmatpush1.msra.mxu0 0.0
    %443 = vmatprep.subr.mxu0 0.0
    %444 = vmatpush1.msra.mxu0 0.0
    %445 = vmatprep.subr.mxu0 0.0
    %446 = vmatpush1.msra.mxu0 0.0
    %447 = vmatprep.subr.mxu0 0.0
    %448 = vmatpush1.msra.mxu0 0.0
    %449 = vmatprep.mubr.f32.mxu0 0.0
    %450 = vmatmul.mubr.f32.gmra.mrb[0].mxu0 %v173
    %v451 = vpop.f32.mrb[0].mxu0
    %v452 = vadd.f32 %v382, %v451
    %v453 = vpop.f32.mrb[0].mxu0
    %454 = vdwg.mxu0
    %vm455 = vcmp.gt.f32.partialorder %v452, 0.0
    %v456 = vmul.f32 %v452, 1.442695
    %v457 = vpow.pop %v456
    %v458 = vsub.f32 %v457, 1.0
    %v459 = vmul.f32 %v458, 1.6732632
    %v460 = vsel %vm455, %v452, %v459
    %v461 = vmul.f32 %v460, 1.050701
    %v462 = vld [vmem:[%s3] sm:$0xff]
    %v463 = vld [vmem:[%s3 + $0x8] sm:$0xff]
    %v464 = vld [vmem:[%s3 + $0x10] sm:$0xff]
    %v465 = vld [vmem:[%s3 + $0x18] sm:$0xff]
    %v466 = vld [vmem:[%s3 + $0x20] sm:$0xff]
    %v467 = vld [vmem:[%s3 + $0x28] sm:$0xff]
    %v468 = vld [vmem:[%s3 + $0x30] sm:$0xff]
    %v469 = vld [vmem:[%s3 + $0x38] sm:$0x1]
    %vm470 = vcmask 465920
    %v472 = vsel %vm470, %v461, 0
    %vm474 = vcmask 1040384
    %v476 = vsel %vm474, %v469, 0
    %478 = vmatprep.subr.mxu0 0.0
    %479 = vmatpush1.msra.mxu0 %v462
    %480 = vmatprep.subr.mxu0 0.0
    %481 = vmatpush1.msra.mxu0 %v463
    %482 = vmatprep.subr.mxu0 0.0
    %483 = vmatpush1.msra.mxu0 %v464
    %484 = vmatprep.subr.mxu0 0.0
    %485 = vmatpush1.msra.mxu0 %v465
    %486 = vmatprep.subr.mxu0 0.0
    %487 = vmatpush1.msra.mxu0 %v466
    %488 = vmatprep.subr.mxu0 0.0
    %489 = vmatpush1.msra.mxu0 %v467
    %490 = vmatprep.subr.mxu0 0.0
    %491 = vmatpush1.msra.mxu0 %v468
    %492 = vmatprep.subr.mxu0 0.0
    %493 = vmatpush1.msra.mxu0 %v476
    %494 = vmatprep.subr.mxu0 0.0
    %495 = vmatpush1.msra.mxu0 0.0
    %496 = vmatprep.subr.mxu0 0.0
    %497 = vmatpush1.msra.mxu0 0.0
    %498 = vmatprep.subr.mxu0 0.0
    %499 = vmatpush1.msra.mxu0 0.0
    %500 = vmatprep.subr.mxu0 0.0
    %501 = vmatpush1.msra.mxu0 0.0
    %502 = vmatprep.subr.mxu0 0.0
    %503 = vmatpush1.msra.mxu0 0.0
    %504 = vmatprep.subr.mxu0 0.0
    %505 = vmatpush1.msra.mxu0 0.0
    %506 = vmatprep.subr.mxu0 0.0
    %507 = vmatpush1.msra.mxu0 0.0
    %508 = vmatprep.subr.mxu0 0.0
    %509 = vmatpush1.msra.mxu0 0.0
    %510 = vmatprep.subr.mxu0 0.0
    %511 = vmatpush1.msra.mxu0 0.0
    %512 = vmatprep.subr.mxu0 0.0
    %513 = vmatpush1.msra.mxu0 0.0
    %514 = vmatprep.subr.mxu0 0.0
    %515 = vmatpush1.msra.mxu0 0.0
    %516 = vmatprep.subr.mxu0 0.0
    %517 = vmatpush1.msra.mxu0 0.0
    %518 = vmatprep.subr.mxu0 0.0
    %519 = vmatpush1.msra.mxu0 0.0
    %520 = vmatprep.subr.mxu0 0.0
    %521 = vmatpush1.msra.mxu0 0.0
    %522 = vmatprep.subr.mxu0 0.0
    %523 = vmatpush1.msra.mxu0 0.0
    %524 = vmatprep.subr.mxu0 0.0
    %525 = vmatpush1.msra.mxu0 0.0
    %526 = vmatprep.subr.mxu0 0.0
    %527 = vmatpush1.msra.mxu0 0.0
    %528 = vmatprep.subr.mxu0 0.0
    %529 = vmatpush1.msra.mxu0 0.0
    %530 = vmatprep.subr.mxu0 0.0
    %531 = vmatpush1.msra.mxu0 0.0
    %532 = vmatprep.subr.mxu0 0.0
    %533 = vmatpush1.msra.mxu0 0.0
    %534 = vmatprep.subr.mxu0 0.0
    %535 = vmatpush1.msra.mxu0 0.0
    %536 = vmatprep.subr.mxu0 0.0
    %537 = vmatpush1.msra.mxu0 0.0
    %538 = vmatprep.subr.mxu0 0.0
    %539 = vmatpush1.msra.mxu0 0.0
    %540 = vmatprep.subr.mxu0 0.0
    %541 = vmatpush1.msra.mxu0 0.0
    %542 = vmatprep.mubr.f32.mxu0 0.0
    %543 = vmatmul.mubr.f32.gmra.mrb[0].mxu0 %v472
    %v544 = vpop.f32.mrb[0].mxu0
    %v545 = vadd.f32 0.0, %v544
    %v546 = vpop.f32.mrb[0].mxu0
    %547 = vdwg.mxu0
    %vm548 = vcmp.gt.f32.partialorder %v545, 0.0
    %v549 = vmul.f32 %v545, 1.442695
    %v550 = vpow.pop %v549
    %v551 = vsub.f32 %v550, 1.0
    %v552 = vmul.f32 %v551, 1.6732632
    %v553 = vsel %vm548, %v545, %v552
    %v554 = vmul.f32 %v553, 1.050701
    %v555 = vld [vmem:[%s4] sm:$0xff]
    %v556 = vld [vmem:[%s4 + $0x8] sm:$0xf]
    %v557 = vld [vmem:[%s5] sm:$0x1]
    %v559 = vlaneseq
    %v560 = vshrl.u32 %v559, 7
    %v561 = vsub.s32 0, %v560
    %v562 = vrot.slane %v557, %v561
    %vm564 = vcmask 97280
    %v566 = vsel %vm564, %v554, 0
    %vm568 = vcmask 1043456
    %v570 = vsel %vm568, %v556, 0
    %572 = vmatprep.subr.mxu0 0.0
    %573 = vmatpush1.msra.mxu0 %v555
    %574 = vmatprep.subr.mxu0 0.0
    %575 = vmatpush1.msra.mxu0 %v570
    %576 = vmatprep.subr.mxu0 0.0
    %577 = vmatpush1.msra.mxu0 0.0
    %578 = vmatprep.subr.mxu0 0.0
    %579 = vmatpush1.msra.mxu0 0.0
    %580 = vmatprep.subr.mxu0 0.0
    %581 = vmatpush1.msra.mxu0 0.0
    %582 = vmatprep.subr.mxu0 0.0
    %583 = vmatpush1.msra.mxu0 0.0
    %584 = vmatprep.subr.mxu0 0.0
    %585 = vmatpush1.msra.mxu0 0.0
    %586 = vmatprep.subr.mxu0 0.0
    %587 = vmatpush1.msra.mxu0 0.0
    %588 = vmatprep.subr.mxu0 0.0
    %589 = vmatpush1.msra.mxu0 0.0
    %590 = vmatprep.subr.mxu0 0.0
    %591 = vmatpush1.msra.mxu0 0.0
    %592 = vmatprep.subr.mxu0 0.0
    %593 = vmatpush1.msra.mxu0 0.0
    %594 = vmatprep.subr.mxu0 0.0
    %595 = vmatpush1.msra.mxu0 0.0
    %596 = vmatprep.subr.mxu0 0.0
    %597 = vmatpush1.msra.mxu0 0.0
    %598 = vmatprep.subr.mxu0 0.0
    %599 = vmatpush1.msra.mxu0 0.0
    %600 = vmatprep.subr.mxu0 0.0
    %601 = vmatpush1.msra.mxu0 0.0
    %602 = vmatprep.subr.mxu0 0.0
    %603 = vmatpush1.msra.mxu0 0.0
    %604 = vmatprep.subr.mxu0 0.0
    %605 = vmatpush1.msra.mxu0 0.0
    %606 = vmatprep.subr.mxu0 0.0
    %607 = vmatpush1.msra.mxu0 0.0
    %608 = vmatprep.subr.mxu0 0.0
    %609 = vmatpush1.msra.mxu0 0.0
    %610 = vmatprep.subr.mxu0 0.0
    %611 = vmatpush1.msra.mxu0 0.0
    %612 = vmatprep.subr.mxu0 0.0
    %613 = vmatpush1.msra.mxu0 0.0
    %614 = vmatprep.subr.mxu0 0.0
    %615 = vmatpush1.msra.mxu0 0.0
    %616 = vmatprep.subr.mxu0 0.0
    %617 = vmatpush1.msra.mxu0 0.0
    %618 = vmatprep.subr.mxu0 0.0
    %619 = vmatpush1.msra.mxu0 0.0
    %620 = vmatprep.subr.mxu0 0.0
    %621 = vmatpush1.msra.mxu0 0.0
    %622 = vmatprep.subr.mxu0 0.0
    %623 = vmatpush1.msra.mxu0 0.0
    %624 = vmatprep.subr.mxu0 0.0
    %625 = vmatpush1.msra.mxu0 0.0
    %626 = vmatprep.subr.mxu0 0.0
    %627 = vmatpush1.msra.mxu0 0.0
    %628 = vmatprep.subr.mxu0 0.0
    %629 = vmatpush1.msra.mxu0 0.0
    %630 = vmatprep.subr.mxu0 0.0
    %631 = vmatpush1.msra.mxu0 0.0
    %632 = vmatprep.subr.mxu0 0.0
    %633 = vmatpush1.msra.mxu0 0.0
    %634 = vmatprep.subr.mxu0 0.0
    %635 = vmatpush1.msra.mxu0 0.0
    %636 = vmatprep.mubr.f32.mxu0 0.0
    %637 = vmatmul.mubr.f32.gmra.mrb[0].mxu0 %v566
    %v638 = vpop.f32.mrb[0].mxu0
    %v639 = vadd.f32 %v562, %v638
    %v640 = vpop.f32.mrb[0].mxu0
    %641 = vdwg.mxu0
    %vm642 = vcmask 74752
    %v643 = vsel %vm642, %v639, -inf
    %644 = vmax.xlane.f32.xlu0 %v643
    %v645 = vpop.xlane.xlu0 %644
    %v646 = vsub.f32 %v639, %v645
    %v647 = vmul.f32 %v646, 1.442695
    %v648 = vpow.pop %v647
    %v649 = vsel %vm642, %v648, 0.0
    %650 = vadd.xlane.f32.xlu0 %v649
    %v651 = vpop.xlane.xlu0 %650
    %v652 = vlog2.pop %v651
    %v653 = vmul.f32 %v652, 0.6931472
    %v654 = vsub.f32 %v646, %v653
    %655 = vst.msk [vmem:[#allocation2] sm:$0x3] %vm642, %v654
    // Predicated region
    $region26: #{linear_selu_12_forward.1} parent=1 // pred_check
      _
    $region27: #{linear_selu_12_forward.1} parent=1 // pred_check_branch
      %657 = sbr.rel (0) target = $region29
    $region28: #{linear_selu_12_forward.1} parent=1 // pred_region
      %s659 = ssub.s32 32, 32
      %660 = vsyncadd [#allocation3], %s659
      %s662 = sshll.u32 [#allocation2], 4
      %s663 = int_to_ptr.vmem [resolvable:$true] %s662
      %665 = dma.vmem_to_hbm [thread:$0]  %s663, 32, %s6, [#allocation3]
    $region29: #{linear_selu_12_forward.1} parent=1 // pred_fallthru
      _
    // Predicated region
    $region30: #{linear_selu_12_forward.1} parent=1 // pred_check
      _
    $region31: #{linear_selu_12_forward.1} parent=1 // pred_check_branch
      %667 = sbr.rel (0) target = $region33
    $region32: #{linear_selu_12_forward.1} parent=1 // pred_region
      %668 = dma.done [#allocation3], 32
    $region33: #{linear_selu_12_forward.1} parent=1 // pred_fallthru
      _
    %669 = vsyncpa [#allocation3], 1

</llo_original>
